<compile_context>
chip_gen: v7x
topology: tpu7x:2x2x1
jax: 0.10.0
libtpu: 0.0.40
codegen_flags: <defaults>
</compile_context>

<pallas_src>
from functools import partial

import jax
import jax.numpy as jnp
from jax.experimental import pallas as pl
from jax.experimental.pallas import tpu as pltpu

N_OBSERVATIONS = 16          # env.n_state = 4 * 4
N_ACTIONS = 16               # env.n_action = 2 ** 4
N_NEURALS = 64
N_HIDDEN_LAYERS = 4          # input layer + n_layers=3 extra hidden layers
N_LAYERS = N_HIDDEN_LAYERS + 1   # + final head
PAD = 128                    # lane-dense padded width for hidden/output layers
BIAS_LANE = PAD - 1          # padded lane that carries a constant 1.0
TILE_M = 1024                # batch tile for large replay-buffer batches


def _dqn_kernel(x_ref, w0_ref, b0_ref, w_ref, out_ref):
    """Fused padded MLP on one batch tile.

    x_ref:   (tile_m, 16)   f32   raw observations (no host-side lane pad)
    w0_ref:  (16, 128)      f32   layer-0 weights, cols >=64 are zero
    b0_ref:  (1, 128)       f32   layer-0 bias; b0[BIAS_LANE]=1 seeds the 1-lane
    w_ref:   (4, 128, 128)  bf16  layers 1..4; row BIAS_LANE holds the bias,
                                  [BIAS_LANE,BIAS_LANE]=1 for hidden layers
    out_ref: (tile_m, 128)  f32   lane-dense output; cols [0,16) are Q-values
    """
    # Layer 0 in f32 (K=16, essentially free) -> no bf16 quantization of the
    # un-normalized inputs.  Lanes 64..126 stay 0, lane 127 becomes 1.0.
    h = jnp.maximum(
        jnp.dot(x_ref[...], w0_ref[...], preferred_element_type=jnp.float32)
        + b0_ref[...],
        0.0)
    # Hidden layers: bf16 MXU inputs, f32 accumulation.  Bias comes in through
    # the MXU via the constant-1 lane, so no VPU bias add; ReLU(1)=1 keeps the
    # constant lane alive for the next layer.
    for i in range(N_LAYERS - 2):
        z = jnp.dot(h.astype(jnp.bfloat16), w_ref[i],
                    preferred_element_type=jnp.float32)
        h = jnp.maximum(z, 0.0)
    # Final head (no ReLU).
    out_ref[...] = jnp.dot(h.astype(jnp.bfloat16), w_ref[N_LAYERS - 2],
                           preferred_element_type=jnp.float32)


def _round_up(x, m):
    return -(-x // m) * m


def _choose_tiling(batch):
    """Returns (padded_batch, tile_m); both static Python ints."""
    if batch <= 64:
        # Tiny per-env-step inference: fixed pow2 buckets keep the jit cache warm.
        b_pad = max(8, pl.next_power_of_2(batch))
        return b_pad, b_pad
    if batch <= 2 * TILE_M:
        # Mid-size batches: bucket to 128 and split into 2 tiles so both
        # v7x TensorCores get a tile ("parallel" grid axis).
        b_pad = _round_up(batch, 128)
        return b_pad, b_pad // 2
    # Large replay batches: big fixed tiles (grid-step overhead amortized),
    # still multiple tiles for megacore.
    return _round_up(batch, TILE_M), TILE_M


@partial(jax.jit, static_argnames=("tile_m",))
def _dqn_pallas(x_p, w0_p, b0_p, w_slab, *, tile_m):
    b_pad = x_p.shape[0]
    return pl.pallas_call(
        _dqn_kernel,
        grid=(b_pad // tile_m,),
        in_specs=[
            # Unpadded activations: last dim == full array dim (16) is legal.
            pl.BlockSpec((tile_m, N_OBSERVATIONS), lambda i: (i, 0)),
            # Grid-invariant params -> stay VMEM-resident across batch tiles.
            pl.BlockSpec((N_OBSERVATIONS, PAD), lambda i: (0, 0)),
            pl.BlockSpec((1, PAD), lambda i: (0, 0)),
            pl.BlockSpec((N_LAYERS - 1, PAD, PAD), lambda i: (0, 0, 0)),
        ],
        out_specs=pl.BlockSpec((tile_m, PAD), lambda i: (i, 0)),
        out_shape=jax.ShapeDtypeStruct((b_pad, PAD), jnp.float32),
        compiler_params=pltpu.CompilerParams(
            dimension_semantics=("parallel",)),
    )(x_p, w0_p, b0_p, w_slab)


def dqn_forward(x, w0_p, b0_p, w_slab):
    """x: (B, 16) float. Returns (B, 16) f32 Q-values."""
    batch = x.shape[0]
    b_pad, tile_m = _choose_tiling(batch)
    x_p = x.astype(jnp.float32)
    if b_pad != batch:
        # Row-only pad of a 16-wide array -- cheap, no 128-lane host scatter.
        x_p = jnp.pad(x_p, ((0, b_pad - batch), (0, 0)))
    q = _dqn_pallas(x_p, w0_p, b0_p, w_slab, tile_m=tile_m)
    return q[:batch, :N_ACTIONS]


def init_dqn_params(key, n_observations=N_OBSERVATIONS, n_actions=N_ACTIONS,
                    n_neurals=N_NEURALS):
    """Per-layer (W, b), W stored as (in, out) = PyTorch weight transposed,
    U(-1/sqrt(fan_in), 1/sqrt(fan_in)) like nn.Linear."""
    dims = [n_observations] + [n_neurals] * N_HIDDEN_LAYERS + [n_actions]
    params = []
    keys = jax.random.split(key, 2 * (len(dims) - 1))
    for i in range(len(dims) - 1):
        fan_in, fan_out = dims[i], dims[i + 1]
        bound = 1.0 / (fan_in ** 0.5)
        w = jax.random.uniform(keys[2 * i], (fan_in, fan_out),
                               minval=-bound, maxval=bound, dtype=jnp.float32)
        b = jax.random.uniform(keys[2 * i + 1], (1, fan_out),
                               minval=-bound, maxval=bound, dtype=jnp.float32)
        params.append((w, b))
    return tuple(params)


def pack_params(params):
    """Pack params once, host-side.

    Layer 0 stays f32 and separate (16x128).  Layers 1..N are packed into one
    zero-padded bf16 slab with biases folded in: lane BIAS_LANE of the
    activations carries a constant 1.0 (seeded by b0, self-propagated through
    each hidden layer by W_aug[BIAS_LANE, BIAS_LANE] = 1 and ReLU(1) = 1), so
    row BIAS_LANE of each W_aug contributes the bias through the MXU.

    Invariant: all other padded rows/cols stay exactly zero so padded lanes of
    the activations remain 0 through every layer.
    """
    assert len(params) == N_LAYERS
    assert BIAS_LANE >= N_NEURALS and BIAS_LANE >= N_ACTIONS

    w0, b0 = params[0]
    assert w0.shape == (N_OBSERVATIONS, N_NEURALS)
    w0_p = jnp.zeros((N_OBSERVATIONS, PAD), jnp.float32)
    w0_p = w0_p.at[:, :N_NEURALS].set(w0)
    b0_p = jnp.zeros((1, PAD), jnp.float32)
    b0_p = b0_p.at[0, :N_NEURALS].set(jnp.reshape(b0, (-1,)))
    b0_p = b0_p.at[0, BIAS_LANE].set(1.0)          # seed the constant-1 lane

    w_slab = jnp.zeros((N_LAYERS - 1, PAD, PAD), jnp.float32)
    for i, (w, b) in enumerate(params[1:]):
        fi, fo = w.shape
        assert fi == N_NEURALS and fo <= N_NEURALS and fo < BIAS_LANE
        w_slab = w_slab.at[i, :fi, :fo].set(w)
        w_slab = w_slab.at[i, BIAS_LANE, :fo].set(jnp.reshape(b, (-1,)))
        if i < N_LAYERS - 2:                       # hidden layers only
            w_slab = w_slab.at[i, BIAS_LANE, BIAS_LANE].set(1.0)
    return w0_p, b0_p, w_slab.astype(jnp.bfloat16)


def dqn_forward_ref_f32(x, params):
    """Pure-f32 JAX reference (PyTorch semantics)."""
    h = x.astype(jnp.float32)
    for w, b in params[:-1]:
        h = jnp.maximum(h @ w + jnp.reshape(b, (1, -1)), 0.0)
    wl, bl = params[-1]
    return h @ wl + jnp.reshape(bl, (1, -1))


def dqn_forward_ref_bf16(x, params):
    """Reference with the kernel's mixed precision: layer 0 f32, later layers
    bf16 matmul inputs + bf16-stored biases, f32 accumulation/ReLU."""
    w0, b0 = params[0]
    h = jnp.maximum(x.astype(jnp.float32) @ w0 + jnp.reshape(b0, (1, -1)), 0.0)
    for w, b in params[1:-1]:
        z = jnp.dot(h.astype(jnp.bfloat16), w.astype(jnp.bfloat16),
                    preferred_element_type=jnp.float32)
        h = jnp.maximum(
            z + jnp.reshape(b, (1, -1)).astype(jnp.bfloat16).astype(jnp.float32),
            0.0)
    wl, bl = params[-1]
    return (jnp.dot(h.astype(jnp.bfloat16), wl.astype(jnp.bfloat16),
                    preferred_element_type=jnp.float32)
            + jnp.reshape(bl, (1, -1)).astype(jnp.bfloat16).astype(jnp.float32))


if __name__ == "__main__":
    key = jax.random.PRNGKey(0)
    pkey, xkey1, xkey2 = jax.random.split(key, 3)

    params = init_dqn_params(pkey)
    w0_p, b0_p, w_slab = pack_params(params)

    # batch=2: tiny per-env-step inference path (single small tile).
    # batch=512: replay-buffer-sized batch exercising the 2-tile parallel grid.
    for batch, xkey in ((2, xkey1), (512, xkey2)):
        # state = 16 waiting-vehicle counts in [0, 100]
        x = jax.random.uniform(xkey, (batch, N_OBSERVATIONS),
                               minval=0.0, maxval=100.0, dtype=jnp.float32)

        q = dqn_forward(x, w0_p, b0_p, w_slab)
        q = jax.block_until_ready(q)
        assert q.shape == (batch, N_ACTIONS)

        q_bf16 = dqn_forward_ref_bf16(x, params)
        q_f32 = dqn_forward_ref_f32(x, params)
        scale = float(jnp.max(jnp.abs(q_bf16))) + 1.0

        # Tight check vs a reference using the same mixed precision.
        assert float(jnp.max(jnp.abs(q - q_bf16))) <= 1e-2 * scale, \
            "mismatch vs bf16 reference"
        # Loose sanity check vs full-f32 semantics (bf16 matmul rounding only).
        assert float(jnp.max(jnp.abs(q - q_f32))) <= 0.2 * scale + 1.0, \
            "mismatch vs f32 reference beyond bf16 rounding"

    print("KERNEL_OK")
</pallas_src>

<mosaic_0001>
module attributes {stable_mosaic.version = 11 : i64} {
  func.func @_dqn_kernel(%arg0: i32, %arg1: memref<8x16xf32, #tpu.memory_space<vmem>>, %arg2: memref<16x128xf32, #tpu.memory_space<vmem>>, %arg3: memref<1x128xf32, #tpu.memory_space<vmem>>, %arg4: memref<4x128x128xbf16, #tpu.memory_space<vmem>>, %arg5: memref<8x128xf32, #tpu.memory_space<vmem>>) attributes {dimension_semantics = [#tpu.dimension_semantics<parallel>], iteration_bounds = array<i64: 1>, scalar_prefetch = 0 : i64, scratch_operands = 0 : i64, tpu.core_type = #tpu.core_type<tc>, window_params = [{transform_indices = @transform_0, window_bounds = array<i64: 8, 16>}, {pipeline_mode = #tpu.pipeline_mode<synchronous>, transform_indices = @transform_1, window_bounds = array<i64: 16, 128>}, {pipeline_mode = #tpu.pipeline_mode<synchronous>, transform_indices = @transform_2, window_bounds = array<i64: 1, 128>}, {pipeline_mode = #tpu.pipeline_mode<synchronous>, transform_indices = @transform_3, window_bounds = array<i64: 4, 128, 128>}, {transform_indices = @transform_4, window_bounds = array<i64: 8, 128>}]} {
    %c0 = arith.constant 0 : index
    %c0_0 = arith.constant 0 : index
    %0 = vector.load %arg1[%c0, %c0_0] : memref<8x16xf32, #tpu.memory_space<vmem>>, vector<8x16xf32>
    %c0_1 = arith.constant 0 : index
    %c0_2 = arith.constant 0 : index
    %1 = vector.load %arg2[%c0_1, %c0_2] : memref<16x128xf32, #tpu.memory_space<vmem>>, vector<16x128xf32>
    %cst = arith.constant dense<0.000000e+00> : vector<8x128xf32>
    %2 = tpu.matmul %0, %1, %cst {dimension_numbers = #tpu.dot_dimension_numbers<[1], [0], [0], [1], [0, 0, 1, 1], [], []>} : vector<8x16xf32>, vector<16x128xf32>, vector<8x128xf32> -> vector<8x128xf32>
    %c0_3 = arith.constant 0 : index
    %c0_4 = arith.constant 0 : index
    %3 = vector.load %arg3[%c0_3, %c0_4] : memref<1x128xf32, #tpu.memory_space<vmem>>, vector<1x128xf32>
    %4 = vector.broadcast %3 : vector<1x128xf32> to vector<8x128xf32>
    %5 = arith.addf %2, %4 : vector<8x128xf32>
    %cst_5 = arith.constant 0.000000e+00 : f32
    %6 = vector.broadcast %cst_5 : f32 to vector<8x128xf32>
    %7 = arith.maximumf %5, %6 : vector<8x128xf32>
    %8 = arith.truncf %7 : vector<8x128xf32> to vector<8x128xbf16>
    %c0_6 = arith.constant 0 : index
    %c0_7 = arith.constant 0 : index
    %c0_8 = arith.constant 0 : index
    %9 = vector.load %arg4[%c0_6, %c0_7, %c0_8] : memref<4x128x128xbf16, #tpu.memory_space<vmem>>, vector<1x128x128xbf16>
    %10 = vector.shape_cast %9 : vector<1x128x128xbf16> to vector<128x128xbf16>
    %cst_9 = arith.constant dense<0.000000e+00> : vector<8x128xf32>
    %11 = tpu.matmul %8, %10, %cst_9 {dimension_numbers = #tpu.dot_dimension_numbers<[1], [0], [0], [1], [0, 0, 1, 1], [], []>} : vector<8x128xbf16>, vector<128x128xbf16>, vector<8x128xf32> -> vector<8x128xf32>
    %cst_10 = arith.constant 0.000000e+00 : f32
    %12 = vector.broadcast %cst_10 : f32 to vector<8x128xf32>
    %13 = arith.maximumf %11, %12 : vector<8x128xf32>
    %14 = arith.truncf %13 : vector<8x128xf32> to vector<8x128xbf16>
    %c1 = arith.constant 1 : index
    %c0_11 = arith.constant 0 : index
    %c0_12 = arith.constant 0 : index
    %15 = vector.load %arg4[%c1, %c0_11, %c0_12] : memref<4x128x128xbf16, #tpu.memory_space<vmem>>, vector<1x128x128xbf16>
    %16 = vector.shape_cast %15 : vector<1x128x128xbf16> to vector<128x128xbf16>
    %cst_13 = arith.constant dense<0.000000e+00> : vector<8x128xf32>
    %17 = tpu.matmul %14, %16, %cst_13 {dimension_numbers = #tpu.dot_dimension_numbers<[1], [0], [0], [1], [0, 0, 1, 1], [], []>} : vector<8x128xbf16>, vector<128x128xbf16>, vector<8x128xf32> -> vector<8x128xf32>
    %cst_14 = arith.constant 0.000000e+00 : f32
    %18 = vector.broadcast %cst_14 : f32 to vector<8x128xf32>
    %19 = arith.maximumf %17, %18 : vector<8x128xf32>
    %20 = arith.truncf %19 : vector<8x128xf32> to vector<8x128xbf16>
    %c2 = arith.constant 2 : index
    %c0_15 = arith.constant 0 : index
    %c0_16 = arith.constant 0 : index
    %21 = vector.load %arg4[%c2, %c0_15, %c0_16] : memref<4x128x128xbf16, #tpu.memory_space<vmem>>, vector<1x128x128xbf16>
    %22 = vector.shape_cast %21 : vector<1x128x128xbf16> to vector<128x128xbf16>
    %cst_17 = arith.constant dense<0.000000e+00> : vector<8x128xf32>
    %23 = tpu.matmul %20, %22, %cst_17 {dimension_numbers = #tpu.dot_dimension_numbers<[1], [0], [0], [1], [0, 0, 1, 1], [], []>} : vector<8x128xbf16>, vector<128x128xbf16>, vector<8x128xf32> -> vector<8x128xf32>
    %cst_18 = arith.constant 0.000000e+00 : f32
    %24 = vector.broadcast %cst_18 : f32 to vector<8x128xf32>
    %25 = arith.maximumf %23, %24 : vector<8x128xf32>
    %26 = arith.truncf %25 : vector<8x128xf32> to vector<8x128xbf16>
    %c3 = arith.constant 3 : index
    %c0_19 = arith.constant 0 : index
    %c0_20 = arith.constant 0 : index
    %27 = vector.load %arg4[%c3, %c0_19, %c0_20] : memref<4x128x128xbf16, #tpu.memory_space<vmem>>, vector<1x128x128xbf16>
    %28 = vector.shape_cast %27 : vector<1x128x128xbf16> to vector<128x128xbf16>
    %cst_21 = arith.constant dense<0.000000e+00> : vector<8x128xf32>
    %29 = tpu.matmul %26, %28, %cst_21 {dimension_numbers = #tpu.dot_dimension_numbers<[1], [0], [0], [1], [0, 0, 1, 1], [], []>} : vector<8x128xbf16>, vector<128x128xbf16>, vector<8x128xf32> -> vector<8x128xf32>
    %c0_22 = arith.constant 0 : index
    %c0_23 = arith.constant 0 : index
    %30 = vector.load %arg5[%c0_22, %c0_23] : memref<8x128xf32, #tpu.memory_space<vmem>>, vector<8x128xf32>
    tpu.vector_store %arg5[%c0_22, %c0_23], %29 {strides = array<i32>} : memref<8x128xf32, #tpu.memory_space<vmem>>, vector<8x128xf32>,
    return
  }
  func.func @transform_0(%arg0: i32) -> (i32, i32) {
    %c0_i32 = arith.constant 0 : i32
    %c0_i32_0 = arith.constant 0 : i32
    return %arg0, %c0_i32 : i32, i32
  }
  func.func @transform_1(%arg0: i32) -> (i32, i32) {
    %c0_i32 = arith.constant 0 : i32
    %c0_i32_0 = arith.constant 0 : i32
    %c0_i32_1 = arith.constant 0 : i32
    return %c0_i32, %c0_i32_0 : i32, i32
  }
  func.func @transform_2(%arg0: i32) -> (i32, i32) {
    %c0_i32 = arith.constant 0 : i32
    %c0_i32_0 = arith.constant 0 : i32
    %c0_i32_1 = arith.constant 0 : i32
    return %c0_i32, %c0_i32_0 : i32, i32
  }
  func.func @transform_3(%arg0: i32) -> (i32, i32, i32) {
    %c0_i32 = arith.constant 0 : i32
    %c0_i32_0 = arith.constant 0 : i32
    %c0_i32_1 = arith.constant 0 : i32
    %c0_i32_2 = arith.constant 0 : i32
    return %c0_i32, %c0_i32_0, %c0_i32_1 : i32, i32, i32
  }
  func.func @transform_4(%arg0: i32) -> (i32, i32) {
    %c0_i32 = arith.constant 0 : i32
    %c0_i32_0 = arith.constant 0 : i32
    return %arg0, %c0_i32 : i32, i32
  }
}

</mosaic_0001>

<llo_original>
// kernel: _dqn_pallas.1
$region0: #{_dqn_pallas.1}
  #allocation0 [shape = 'u32[]', space=smem, size = 0x4, offset = 0x4, fixed_abs, tag = 'smem constant byte address 0x4 - core index']
  #allocation1 [shape = 'u32[144,128]{1,0:T(1,128)}', space=vmem, size = 0x12000, scoped, tag = 'internal scratch']
  %s0 = inlined_call_operand.hbm [shape: f32[8,16], index: 0, kind: input, shape index: {}]
  %s1 = inlined_call_operand.hbm [shape: f32[16,128], index: 1, kind: input, shape index: {}]
  %s2 = inlined_call_operand.vmem [shape: f32[1,128], index: 2, kind: input, shape index: {}]
  %s3 = inlined_call_operand.hbm [shape: bf16[4,128,128], index: 3, kind: input, shape index: {}]
  %s4 = inlined_call_operand.hbm [shape: f32[8,128], index: 4, kind: output, shape index: {}]
  %s5 = sld [smem:[#allocation0]]
  $region38: #{_dqn_pallas.1} parent=0
    _
  %s7 = ssub.s32 1, %s5
  %s8 = scalar_select 0, %s7, %s5
  $region1: #{_dqn_pallas.1} parent=0
    #allocation2 [shape = 'u8[4096]{0}', space=vmem, size = 0x1000, scoped, tag = 'input window, operand 0, single buffered']
    #allocation3 [shape = 's32[1]{0}', space=sflag, size = 0x4, scoped, tag = 'scoped memory for _dqn_pallas.1']
    #allocation4 [shape = 's32[1]{0}', space=sflag, size = 0x4, scoped, tag = 'scoped memory for _dqn_pallas.1']
    #allocation5 [shape = 'u8[8192]{0}', space=vmem, size = 0x2000, scoped, tag = 'input window, operand 1, single buffered']
    #allocation6 [shape = 's32[1]{0}', space=sflag, size = 0x4, scoped, tag = 'scoped memory for _dqn_pallas.1']
    #allocation7 [shape = 'u8[131072]{0}', space=vmem, size = 0x20000, scoped, tag = 'input window, operand 3, single buffered']
    #allocation8 [shape = 'u8[4096]{0}', space=vmem, size = 0x1000, scoped, tag = 'output window, operand 0, single buffered']
    %9 = vsyncpa [#allocation3], 0
    %10 = vsyncpa [#allocation6], 0
    %11 = vsyncpa [#allocation4], 0
    // Predicated region
    $region2: #{_dqn_pallas.1} parent=1 // pred_check
      _
    $region3: #{_dqn_pallas.1} parent=1 // pred_check_branch
      %13 = sbr.rel (0) target = $region5
    $region4: #{_dqn_pallas.1} parent=1 // pred_region
      %s15 = ssub.s32 128, 128
      %16 = vsyncadd [#allocation3], %s15
      %s18 = sshll.u32 [#allocation2], 4
      %s19 = int_to_ptr.vmem [resolvable:$true] %s18
      %21 = dma.hbm_to_vmem [thread:$0]  %s0, 128, %s19, [#allocation3]
    $region5: #{_dqn_pallas.1} parent=1 // pred_fallthru
      _
    // Predicated region
    $region6: #{_dqn_pallas.1} parent=1 // pred_check
      _
    $region7: #{_dqn_pallas.1} parent=1 // pred_check_branch
      %23 = sbr.rel (0) target = $region9
    $region8: #{_dqn_pallas.1} parent=1 // pred_region
      %s25 = ssub.s32 256, 256
      %26 = vsyncadd [#allocation6], %s25
      %s27 = sshll.u32 [#allocation5], 4
      %s28 = int_to_ptr.vmem [resolvable:$true] %s27
      %33 = dma.hbm_to_vmem [thread:$0]  %s1, 256, %s28, [#allocation6], 128, 128, 8
    $region9: #{_dqn_pallas.1} parent=1 // pred_fallthru
      _
    // Predicated region
    $region10: #{_dqn_pallas.1} parent=1 // pred_check
      _
    $region11: #{_dqn_pallas.1} parent=1 // pred_check_branch
      %35 = sbr.rel (0) target = $region13
    $region12: #{_dqn_pallas.1} parent=1 // pred_region
      _
    $region13: #{_dqn_pallas.1} parent=1 // pred_fallthru
      _
    // Predicated region
    $region14: #{_dqn_pallas.1} parent=1 // pred_check
      _
    $region15: #{_dqn_pallas.1} parent=1 // pred_check_branch
      %37 = sbr.rel (0) target = $region17
    $region16: #{_dqn_pallas.1} parent=1 // pred_region
      %s39 = ssub.s32 4096, 4096
      %40 = vsyncadd [#allocation6], %s39
      %s41 = sshll.u32 [#allocation7], 4
      %s42 = int_to_ptr.vmem [resolvable:$true] %s41
      %47 = dma.hbm_to_vmem [thread:$0]  %s3, 4096, %s42, [#allocation6], 64, 64, 4
    $region17: #{_dqn_pallas.1} parent=1 // pred_fallthru
      _
    // Predicated region
    $region18: #{_dqn_pallas.1} parent=1 // pred_check
      _
    $region19: #{_dqn_pallas.1} parent=1 // pred_check_branch
      %49 = sbr.rel (0) target = $region21
    $region20: #{_dqn_pallas.1} parent=1 // pred_region
      %50 = dma.done [#allocation3], 128
    $region21: #{_dqn_pallas.1} parent=1 // pred_fallthru
      _
    // Predicated region
    $region22: #{_dqn_pallas.1} parent=1 // pred_check
      _
    $region23: #{_dqn_pallas.1} parent=1 // pred_check_branch
      %52 = sbr.rel (0) target = $region25
    $region24: #{_dqn_pallas.1} parent=1 // pred_region
      %53 = dma.done [#allocation6], 256
    $region25: #{_dqn_pallas.1} parent=1 // pred_fallthru
      _
    // Predicated region
    $region26: #{_dqn_pallas.1} parent=1 // pred_check
      _
    $region27: #{_dqn_pallas.1} parent=1 // pred_check_branch
      %55 = sbr.rel (0) target = $region29
    $region28: #{_dqn_pallas.1} parent=1 // pred_region
      %56 = dma.done [#allocation6], 4096
    $region29: #{_dqn_pallas.1} parent=1 // pred_fallthru
      _
    %v58 = vld [vmem:[#allocation2] sm:$0xff]
    %v59 = vld [vmem:[#allocation5] sm:$0xff]
    %v60 = vld [vmem:[#allocation5 + $0x8] sm:$0xff]
    %v61 = vld [vmem:[%s2] sm:$0x1]
    %v63 = vlaneseq
    %v64 = vshrl.u32 %v63, 7
    %v65 = vsub.s32 0, %v64
    %v66 = vrot.slane %v61, %v65
    %vm68 = vcmask 130048
    %v70 = vsel %vm68, %v58, 0
    %72 = vmatprep.subr.mxu0 0.0
    %73 = vmatpush1.msra.mxu0 %v59
    %74 = vmatprep.subr.mxu0 0.0
    %75 = vmatpush1.msra.mxu0 %v60
    %76 = vmatprep.subr.mxu0 0.0
    %77 = vmatpush1.msra.mxu0 0.0
    %78 = vmatprep.subr.mxu0 0.0
    %79 = vmatpush1.msra.mxu0 0.0
    %80 = vmatprep.subr.mxu0 0.0
    %81 = vmatpush1.msra.mxu0 0.0
    %82 = vmatprep.subr.mxu0 0.0
    %83 = vmatpush1.msra.mxu0 0.0
    %84 = vmatprep.subr.mxu0 0.0
    %85 = vmatpush1.msra.mxu0 0.0
    %86 = vmatprep.subr.mxu0 0.0
    %87 = vmatpush1.msra.mxu0 0.0
    %88 = vmatprep.subr.mxu0 0.0
    %89 = vmatpush1.msra.mxu0 0.0
    %90 = vmatprep.subr.mxu0 0.0
    %91 = vmatpush1.msra.mxu0 0.0
    %92 = vmatprep.subr.mxu0 0.0
    %93 = vmatpush1.msra.mxu0 0.0
    %94 = vmatprep.subr.mxu0 0.0
    %95 = vmatpush1.msra.mxu0 0.0
    %96 = vmatprep.subr.mxu0 0.0
    %97 = vmatpush1.msra.mxu0 0.0
    %98 = vmatprep.subr.mxu0 0.0
    %99 = vmatpush1.msra.mxu0 0.0
    %100 = vmatprep.subr.mxu0 0.0
    %101 = vmatpush1.msra.mxu0 0.0
    %102 = vmatprep.subr.mxu0 0.0
    %103 = vmatpush1.msra.mxu0 0.0
    %104 = vmatprep.subr.mxu0 0.0
    %105 = vmatpush1.msra.mxu0 0.0
    %106 = vmatprep.subr.mxu0 0.0
    %107 = vmatpush1.msra.mxu0 0.0
    %108 = vmatprep.subr.mxu0 0.0
    %109 = vmatpush1.msra.mxu0 0.0
    %110 = vmatprep.subr.mxu0 0.0
    %111 = vmatpush1.msra.mxu0 0.0
    %112 = vmatprep.subr.mxu0 0.0
    %113 = vmatpush1.msra.mxu0 0.0
    %114 = vmatprep.subr.mxu0 0.0
    %115 = vmatpush1.msra.mxu0 0.0
    %116 = vmatprep.subr.mxu0 0.0
    %117 = vmatpush1.msra.mxu0 0.0
    %118 = vmatprep.subr.mxu0 0.0
    %119 = vmatpush1.msra.mxu0 0.0
    %120 = vmatprep.subr.mxu0 0.0
    %121 = vmatpush1.msra.mxu0 0.0
    %122 = vmatprep.subr.mxu0 0.0
    %123 = vmatpush1.msra.mxu0 0.0
    %124 = vmatprep.subr.mxu0 0.0
    %125 = vmatpush1.msra.mxu0 0.0
    %126 = vmatprep.subr.mxu0 0.0
    %127 = vmatpush1.msra.mxu0 0.0
    %128 = vmatprep.subr.mxu0 0.0
    %129 = vmatpush1.msra.mxu0 0.0
    %130 = vmatprep.subr.mxu0 0.0
    %131 = vmatpush1.msra.mxu0 0.0
    %132 = vmatprep.subr.mxu0 0.0
    %133 = vmatpush1.msra.mxu0 0.0
    %134 = vmatprep.subr.mxu0 0.0
    %135 = vmatpush1.msra.mxu0 0.0
    %136 = vmatprep.mubr.f32.mxu0 0.0
    %137 = vmatmul.mubr.f32.gmra.mrb[0].mxu0 %v70
    %v138 = vpop.f32.mrb[0].mxu0
    %v139 = vadd.f32 %v66, %v138
    %v140 = vpop.f32.mrb[0].mxu0
    %141 = vdwg.mxu0
    %v142 = vmax.f32 %v139, 0.0
    %v143 = vpack.c.bf16 %v142, %v142
    %v144 = vld [vmem:[#allocation7] sm:$0xf]
    %v145 = vld [vmem:[#allocation7 + $0x4] sm:$0xf]
    %v146 = vld [vmem:[#allocation7 + $0x8] sm:$0xf]
    %v147 = vld [vmem:[#allocation7 + $0xc] sm:$0xf]
    %v148 = vld [vmem:[#allocation7 + $0x10] sm:$0xf]
    %v149 = vld [vmem:[#allocation7 + $0x14] sm:$0xf]
    %v150 = vld [vmem:[#allocation7 + $0x18] sm:$0xf]
    %v151 = vld [vmem:[#allocation7 + $0x1c] sm:$0xf]
    %v152 = vld [vmem:[#allocation7 + $0x20] sm:$0xf]
    %v153 = vld [vmem:[#allocation7 + $0x24] sm:$0xf]
    %v154 = vld [vmem:[#allocation7 + $0x28] sm:$0xf]
    %v155 = vld [vmem:[#allocation7 + $0x2c] sm:$0xf]
    %v156 = vld [vmem:[#allocation7 + $0x30] sm:$0xf]
    %v157 = vld [vmem:[#allocation7 + $0x34] sm:$0xf]
    %v158 = vld [vmem:[#allocation7 + $0x38] sm:$0xf]
    %v159 = vld [vmem:[#allocation7 + $0x3c] sm:$0xf]
    %v176 = vunpack.c.l.b16 %v144
    %v177 = vunpack.c.l.b16 %v145
    %v178 = vunpack.c.l.b16 %v146
    %v179 = vunpack.c.l.b16 %v147
    %v180 = vunpack.c.l.b16 %v148
    %v181 = vunpack.c.l.b16 %v149
    %v182 = vunpack.c.l.b16 %v150
    %v183 = vunpack.c.l.b16 %v151
    %v184 = vunpack.c.l.b16 %v152
    %v185 = vunpack.c.l.b16 %v153
    %v186 = vunpack.c.l.b16 %v154
    %v187 = vunpack.c.l.b16 %v155
    %v188 = vunpack.c.l.b16 %v156
    %v189 = vunpack.c.l.b16 %v157
    %v190 = vunpack.c.l.b16 %v158
    %v191 = vunpack.c.l.b16 %v159
    %v192 = vpack.c.b16 %v177, %v176
    %v193 = vpack.c.b16 %v179, %v178
    %v194 = vpack.c.b16 %v181, %v180
    %v195 = vpack.c.b16 %v183, %v182
    %v196 = vpack.c.b16 %v185, %v184
    %v197 = vpack.c.b16 %v187, %v186
    %v198 = vpack.c.b16 %v189, %v188
    %v199 = vpack.c.b16 %v191, %v190
    %208 = vmatprep.subr.bf16.mxu0 0
    %209 = vmatpush1.bf16.msra.mxu0 %v192
    %210 = vmatprep.subr.bf16.mxu0 0
    %211 = vmatpush1.bf16.msra.mxu0 %v193
    %212 = vmatprep.subr.bf16.mxu0 0
    %213 = vmatpush1.bf16.msra.mxu0 %v194
    %214 = vmatprep.subr.bf16.mxu0 0
    %215 = vmatpush1.bf16.msra.mxu0 %v195
    %216 = vmatprep.subr.bf16.mxu0 0
    %217 = vmatpush1.bf16.msra.mxu0 %v196
    %218 = vmatprep.subr.bf16.mxu0 0
    %219 = vmatpush1.bf16.msra.mxu0 %v197
    %220 = vmatprep.subr.bf16.mxu0 0
    %221 = vmatpush1.bf16.msra.mxu0 %v198
    %222 = vmatprep.subr.bf16.mxu0 0
    %223 = vmatpush1.bf16.msra.mxu0 %v199
    %224 = vmatprep.subr.bf16.mxu0 0
    %225 = vmatpush1.bf16.msra.mxu0 0
    %226 = vmatprep.subr.bf16.mxu0 0
    %227 = vmatpush1.bf16.msra.mxu0 0
    %228 = vmatprep.subr.bf16.mxu0 0
    %229 = vmatpush1.bf16.msra.mxu0 0
    %230 = vmatprep.subr.bf16.mxu0 0
    %231 = vmatpush1.bf16.msra.mxu0 0
    %232 = vmatprep.subr.bf16.mxu0 0
    %233 = vmatpush1.bf16.msra.mxu0 0
    %234 = vmatprep.subr.bf16.mxu0 0
    %235 = vmatpush1.bf16.msra.mxu0 0
    %236 = vmatprep.subr.bf16.mxu0 0
    %237 = vmatpush1.bf16.msra.mxu0 0
    %238 = vmatprep.subr.bf16.mxu0 0
    %239 = vmatpush1.bf16.msra.mxu0 0
    %240 = vmatprep.mubr.bf16.mxu0 0
    %241 = vmatmul.mubr.bf16.gmra.mrb[0].mxu0 %v143
    %v242 = vpop.f32.mrb[0].mxu0
    %v243 = vadd.f32 0.0, %v242
    %v244 = vpop.f32.mrb[0].mxu0
    %v245 = vpop.f32.mrb[0].mxu0
    %v246 = vpop.f32.mrb[0].mxu0
    %247 = vdwg.mxu0
    %v248 = vmax.f32 %v243, 0.0
    %v249 = vpack.c.bf16 %v248, %v248
    %s250 = scalar_lea.vmem [#allocation7], 64
    %v251 = vld [vmem:[%s250] sm:$0xf]
    %v252 = vld [vmem:[%s250 + $0x4] sm:$0xf]
    %v253 = vld [vmem:[%s250 + $0x8] sm:$0xf]
    %v254 = vld [vmem:[%s250 + $0xc] sm:$0xf]
    %v255 = vld [vmem:[%s250 + $0x10] sm:$0xf]
    %v256 = vld [vmem:[%s250 + $0x14] sm:$0xf]
    %v257 = vld [vmem:[%s250 + $0x18] sm:$0xf]
    %v258 = vld [vmem:[%s250 + $0x1c] sm:$0xf]
    %v259 = vld [vmem:[%s250 + $0x20] sm:$0xf]
    %v260 = vld [vmem:[%s250 + $0x24] sm:$0xf]
    %v261 = vld [vmem:[%s250 + $0x28] sm:$0xf]
    %v262 = vld [vmem:[%s250 + $0x2c] sm:$0xf]
    %v263 = vld [vmem:[%s250 + $0x30] sm:$0xf]
    %v264 = vld [vmem:[%s250 + $0x34] sm:$0xf]
    %v265 = vld [vmem:[%s250 + $0x38] sm:$0xf]
    %v266 = vld [vmem:[%s250 + $0x3c] sm:$0xf]
    %v283 = vunpack.c.l.b16 %v251
    %v284 = vunpack.c.l.b16 %v252
    %v285 = vunpack.c.l.b16 %v253
    %v286 = vunpack.c.l.b16 %v254
    %v287 = vunpack.c.l.b16 %v255
    %v288 = vunpack.c.l.b16 %v256
    %v289 = vunpack.c.l.b16 %v257
    %v290 = vunpack.c.l.b16 %v258
    %v291 = vunpack.c.l.b16 %v259
    %v292 = vunpack.c.l.b16 %v260
    %v293 = vunpack.c.l.b16 %v261
    %v294 = vunpack.c.l.b16 %v262
    %v295 = vunpack.c.l.b16 %v263
    %v296 = vunpack.c.l.b16 %v264
    %v297 = vunpack.c.l.b16 %v265
    %v298 = vunpack.c.l.b16 %v266
    %v299 = vpack.c.b16 %v284, %v283
    %v300 = vpack.c.b16 %v286, %v285
    %v301 = vpack.c.b16 %v288, %v287
    %v302 = vpack.c.b16 %v290, %v289
    %v303 = vpack.c.b16 %v292, %v291
    %v304 = vpack.c.b16 %v294, %v293
    %v305 = vpack.c.b16 %v296, %v295
    %v306 = vpack.c.b16 %v298, %v297
    %315 = vmatprep.subr.bf16.mxu0 0
    %316 = vmatpush1.bf16.msra.mxu0 %v299
    %317 = vmatprep.subr.bf16.mxu0 0
    %318 = vmatpush1.bf16.msra.mxu0 %v300
    %319 = vmatprep.subr.bf16.mxu0 0
    %320 = vmatpush1.bf16.msra.mxu0 %v301
    %321 = vmatprep.subr.bf16.mxu0 0
    %322 = vmatpush1.bf16.msra.mxu0 %v302
    %323 = vmatprep.subr.bf16.mxu0 0
    %324 = vmatpush1.bf16.msra.mxu0 %v303
    %325 = vmatprep.subr.bf16.mxu0 0
    %326 = vmatpush1.bf16.msra.mxu0 %v304
    %327 = vmatprep.subr.bf16.mxu0 0
    %328 = vmatpush1.bf16.msra.mxu0 %v305
    %329 = vmatprep.subr.bf16.mxu0 0
    %330 = vmatpush1.bf16.msra.mxu0 %v306
    %331 = vmatprep.subr.bf16.mxu0 0
    %332 = vmatpush1.bf16.msra.mxu0 0
    %333 = vmatprep.subr.bf16.mxu0 0
    %334 = vmatpush1.bf16.msra.mxu0 0
    %335 = vmatprep.subr.bf16.mxu0 0
    %336 = vmatpush1.bf16.msra.mxu0 0
    %337 = vmatprep.subr.bf16.mxu0 0
    %338 = vmatpush1.bf16.msra.mxu0 0
    %339 = vmatprep.subr.bf16.mxu0 0
    %340 = vmatpush1.bf16.msra.mxu0 0
    %341 = vmatprep.subr.bf16.mxu0 0
    %342 = vmatpush1.bf16.msra.mxu0 0
    %343 = vmatprep.subr.bf16.mxu0 0
    %344 = vmatpush1.bf16.msra.mxu0 0
    %345 = vmatprep.subr.bf16.mxu0 0
    %346 = vmatpush1.bf16.msra.mxu0 0
    %347 = vmatprep.mubr.bf16.mxu0 0
    %348 = vmatmul.mubr.bf16.gmra.mrb[0].mxu0 %v249
    %v349 = vpop.f32.mrb[0].mxu0
    %v350 = vadd.f32 0.0, %v349
    %v351 = vpop.f32.mrb[0].mxu0
    %v352 = vpop.f32.mrb[0].mxu0
    %v353 = vpop.f32.mrb[0].mxu0
    %354 = vdwg.mxu0
    %v355 = vmax.f32 %v350, 0.0
    %v356 = vpack.c.bf16 %v355, %v355
    %s357 = scalar_lea.vmem [#allocation7], 128
    %v358 = vld [vmem:[%s357] sm:$0xf]
    %v359 = vld [vmem:[%s357 + $0x4] sm:$0xf]
    %v360 = vld [vmem:[%s357 + $0x8] sm:$0xf]
    %v361 = vld [vmem:[%s357 + $0xc] sm:$0xf]
    %v362 = vld [vmem:[%s357 + $0x10] sm:$0xf]
    %v363 = vld [vmem:[%s357 + $0x14] sm:$0xf]
    %v364 = vld [vmem:[%s357 + $0x18] sm:$0xf]
    %v365 = vld [vmem:[%s357 + $0x1c] sm:$0xf]
    %v366 = vld [vmem:[%s357 + $0x20] sm:$0xf]
    %v367 = vld [vmem:[%s357 + $0x24] sm:$0xf]
    %v368 = vld [vmem:[%s357 + $0x28] sm:$0xf]
    %v369 = vld [vmem:[%s357 + $0x2c] sm:$0xf]
    %v370 = vld [vmem:[%s357 + $0x30] sm:$0xf]
    %v371 = vld [vmem:[%s357 + $0x34] sm:$0xf]
    %v372 = vld [vmem:[%s357 + $0x38] sm:$0xf]
    %v373 = vld [vmem:[%s357 + $0x3c] sm:$0xf]
    %v390 = vunpack.c.l.b16 %v358
    %v391 = vunpack.c.l.b16 %v359
    %v392 = vunpack.c.l.b16 %v360
    %v393 = vunpack.c.l.b16 %v361
    %v394 = vunpack.c.l.b16 %v362
    %v395 = vunpack.c.l.b16 %v363
    %v396 = vunpack.c.l.b16 %v364
    %v397 = vunpack.c.l.b16 %v365
    %v398 = vunpack.c.l.b16 %v366
    %v399 = vunpack.c.l.b16 %v367
    %v400 = vunpack.c.l.b16 %v368
    %v401 = vunpack.c.l.b16 %v369
    %v402 = vunpack.c.l.b16 %v370
    %v403 = vunpack.c.l.b16 %v371
    %v404 = vunpack.c.l.b16 %v372
    %v405 = vunpack.c.l.b16 %v373
    %v406 = vpack.c.b16 %v391, %v390
    %v407 = vpack.c.b16 %v393, %v392
    %v408 = vpack.c.b16 %v395, %v394
    %v409 = vpack.c.b16 %v397, %v396
    %v410 = vpack.c.b16 %v399, %v398
    %v411 = vpack.c.b16 %v401, %v400
    %v412 = vpack.c.b16 %v403, %v402
    %v413 = vpack.c.b16 %v405, %v404
    %422 = vmatprep.subr.bf16.mxu0 0
    %423 = vmatpush1.bf16.msra.mxu0 %v406
    %424 = vmatprep.subr.bf16.mxu0 0
    %425 = vmatpush1.bf16.msra.mxu0 %v407
    %426 = vmatprep.subr.bf16.mxu0 0
    %427 = vmatpush1.bf16.msra.mxu0 %v408
    %428 = vmatprep.subr.bf16.mxu0 0
    %429 = vmatpush1.bf16.msra.mxu0 %v409
    %430 = vmatprep.subr.bf16.mxu0 0
    %431 = vmatpush1.bf16.msra.mxu0 %v410
    %432 = vmatprep.subr.bf16.mxu0 0
    %433 = vmatpush1.bf16.msra.mxu0 %v411
    %434 = vmatprep.subr.bf16.mxu0 0
    %435 = vmatpush1.bf16.msra.mxu0 %v412
    %436 = vmatprep.subr.bf16.mxu0 0
    %437 = vmatpush1.bf16.msra.mxu0 %v413
    %438 = vmatprep.subr.bf16.mxu0 0
    %439 = vmatpush1.bf16.msra.mxu0 0
    %440 = vmatprep.subr.bf16.mxu0 0
    %441 = vmatpush1.bf16.msra.mxu0 0
    %442 = vmatprep.subr.bf16.mxu0 0
    %443 = vmatpush1.bf16.msra.mxu0 0
    %444 = vmatprep.subr.bf16.mxu0 0
    %445 = vmatpush1.bf16.msra.mxu0 0
    %446 = vmatprep.subr.bf16.mxu0 0
    %447 = vmatpush1.bf16.msra.mxu0 0
    %448 = vmatprep.subr.bf16.mxu0 0
    %449 = vmatpush1.bf16.msra.mxu0 0
    %450 = vmatprep.subr.bf16.mxu0 0
    %451 = vmatpush1.bf16.msra.mxu0 0
    %452 = vmatprep.subr.bf16.mxu0 0
    %453 = vmatpush1.bf16.msra.mxu0 0
    %454 = vmatprep.mubr.bf16.mxu0 0
    %455 = vmatmul.mubr.bf16.gmra.mrb[0].mxu0 %v356
    %v456 = vpop.f32.mrb[0].mxu0
    %v457 = vadd.f32 0.0, %v456
    %v458 = vpop.f32.mrb[0].mxu0
    %v459 = vpop.f32.mrb[0].mxu0
    %v460 = vpop.f32.mrb[0].mxu0
    %461 = vdwg.mxu0
    %v462 = vmax.f32 %v457, 0.0
    %v463 = vpack.c.bf16 %v462, %v462
    %s464 = scalar_lea.vmem [#allocation7], 192
    %v465 = vld [vmem:[%s464] sm:$0xf]
    %v466 = vld [vmem:[%s464 + $0x4] sm:$0xf]
    %v467 = vld [vmem:[%s464 + $0x8] sm:$0xf]
    %v468 = vld [vmem:[%s464 + $0xc] sm:$0xf]
    %v469 = vld [vmem:[%s464 + $0x10] sm:$0xf]
    %v470 = vld [vmem:[%s464 + $0x14] sm:$0xf]
    %v471 = vld [vmem:[%s464 + $0x18] sm:$0xf]
    %v472 = vld [vmem:[%s464 + $0x1c] sm:$0xf]
    %v473 = vld [vmem:[%s464 + $0x20] sm:$0xf]
    %v474 = vld [vmem:[%s464 + $0x24] sm:$0xf]
    %v475 = vld [vmem:[%s464 + $0x28] sm:$0xf]
    %v476 = vld [vmem:[%s464 + $0x2c] sm:$0xf]
    %v477 = vld [vmem:[%s464 + $0x30] sm:$0xf]
    %v478 = vld [vmem:[%s464 + $0x34] sm:$0xf]
    %v479 = vld [vmem:[%s464 + $0x38] sm:$0xf]
    %v480 = vld [vmem:[%s464 + $0x3c] sm:$0xf]
    %v497 = vunpack.c.l.b16 %v465
    %v498 = vunpack.c.l.b16 %v466
    %v499 = vunpack.c.l.b16 %v467
    %v500 = vunpack.c.l.b16 %v468
    %v501 = vunpack.c.l.b16 %v469
    %v502 = vunpack.c.l.b16 %v470
    %v503 = vunpack.c.l.b16 %v471
    %v504 = vunpack.c.l.b16 %v472
    %v505 = vunpack.c.l.b16 %v473
    %v506 = vunpack.c.l.b16 %v474
    %v507 = vunpack.c.l.b16 %v475
    %v508 = vunpack.c.l.b16 %v476
    %v509 = vunpack.c.l.b16 %v477
    %v510 = vunpack.c.l.b16 %v478
    %v511 = vunpack.c.l.b16 %v479
    %v512 = vunpack.c.l.b16 %v480
    %v513 = vpack.c.b16 %v498, %v497
    %v514 = vpack.c.b16 %v500, %v499
    %v515 = vpack.c.b16 %v502, %v501
    %v516 = vpack.c.b16 %v504, %v503
    %v517 = vpack.c.b16 %v506, %v505
    %v518 = vpack.c.b16 %v508, %v507
    %v519 = vpack.c.b16 %v510, %v509
    %v520 = vpack.c.b16 %v512, %v511
    %529 = vmatprep.subr.bf16.mxu0 0
    %530 = vmatpush1.bf16.msra.mxu0 %v513
    %531 = vmatprep.subr.bf16.mxu0 0
    %532 = vmatpush1.bf16.msra.mxu0 %v514
    %533 = vmatprep.subr.bf16.mxu0 0
    %534 = vmatpush1.bf16.msra.mxu0 %v515
    %535 = vmatprep.subr.bf16.mxu0 0
    %536 = vmatpush1.bf16.msra.mxu0 %v516
    %537 = vmatprep.subr.bf16.mxu0 0
    %538 = vmatpush1.bf16.msra.mxu0 %v517
    %539 = vmatprep.subr.bf16.mxu0 0
    %540 = vmatpush1.bf16.msra.mxu0 %v518
    %541 = vmatprep.subr.bf16.mxu0 0
    %542 = vmatpush1.bf16.msra.mxu0 %v519
    %543 = vmatprep.subr.bf16.mxu0 0
    %544 = vmatpush1.bf16.msra.mxu0 %v520
    %545 = vmatprep.subr.bf16.mxu0 0
    %546 = vmatpush1.bf16.msra.mxu0 0
    %547 = vmatprep.subr.bf16.mxu0 0
    %548 = vmatpush1.bf16.msra.mxu0 0
    %549 = vmatprep.subr.bf16.mxu0 0
    %550 = vmatpush1.bf16.msra.mxu0 0
    %551 = vmatprep.subr.bf16.mxu0 0
    %552 = vmatpush1.bf16.msra.mxu0 0
    %553 = vmatprep.subr.bf16.mxu0 0
    %554 = vmatpush1.bf16.msra.mxu0 0
    %555 = vmatprep.subr.bf16.mxu0 0
    %556 = vmatpush1.bf16.msra.mxu0 0
    %557 = vmatprep.subr.bf16.mxu0 0
    %558 = vmatpush1.bf16.msra.mxu0 0
    %559 = vmatprep.subr.bf16.mxu0 0
    %560 = vmatpush1.bf16.msra.mxu0 0
    %561 = vmatprep.mubr.bf16.mxu0 0
    %562 = vmatmul.mubr.bf16.gmra.mrb[0].mxu0 %v463
    %v563 = vpop.f32.mrb[0].mxu0
    %v564 = vadd.f32 0.0, %v563
    %v565 = vpop.f32.mrb[0].mxu0
    %v566 = vpop.f32.mrb[0].mxu0
    %v567 = vpop.f32.mrb[0].mxu0
    %568 = vdwg.mxu0
    %569 = vst [vmem:[#allocation8] sm:$0xff] %v564
    // Predicated region
    $region30: #{_dqn_pallas.1} parent=1 // pred_check
      _
    $region31: #{_dqn_pallas.1} parent=1 // pred_check_branch
      %571 = sbr.rel (0) target = $region33
    $region32: #{_dqn_pallas.1} parent=1 // pred_region
      %s573 = ssub.s32 128, 128
      %574 = vsyncadd [#allocation4], %s573
      %s576 = sshll.u32 [#allocation8], 4
      %s577 = int_to_ptr.vmem [resolvable:$true] %s576
      %579 = dma.vmem_to_hbm [thread:$0]  %s577, 128, %s4, [#allocation4]
    $region33: #{_dqn_pallas.1} parent=1 // pred_fallthru
      _
    // Predicated region
    $region34: #{_dqn_pallas.1} parent=1 // pred_check
      _
    $region35: #{_dqn_pallas.1} parent=1 // pred_check_branch
      %581 = sbr.rel (0) target = $region37
    $region36: #{_dqn_pallas.1} parent=1 // pred_region
      %582 = dma.done [#allocation4], 128
    $region37: #{_dqn_pallas.1} parent=1 // pred_fallthru
      _
    %583 = vsyncpa [#allocation3], 1
    %584 = vsyncpa [#allocation6], 1
    %585 = vsyncpa [#allocation4], 1

</llo_original>
